<compile_context>
chip_gen: v7x
topology: tpu7x:2x2x1
jax: 0.10.0
libtpu: 0.0.40
codegen_flags: <defaults>
</compile_context>

<pallas_src>
import functools

import numpy as np
import jax
import jax.numpy as jnp
from jax import lax
from jax.experimental import pallas as pl
from jax.experimental.pallas import tpu as pltpu


# ---------------------------------------------------------------------------
# Glue: build the fused (ifft2 o crop o fft2) -> real transform matrix.
# ---------------------------------------------------------------------------
def _dft_matrix(n):
    k = np.arange(n)
    return np.exp(-2j * np.pi * np.outer(k, k) / n).astype(np.complex64)


def _idft_matrix(n):
    k = np.arange(n)
    return (np.exp(2j * np.pi * np.outer(k, k) / n) / n).astype(np.complex64)


def _selection_matrix(filter_size, dim):
    """fs x dim matrix reproducing Common_spectral_pool's row/col selection.

    NOTE: only the odd filter_size branch is validated against the FFT
    reference below; the even branch mirrors the PyTorch code but is untested.
    """
    assert filter_size >= 3
    s = np.zeros((filter_size, dim), dtype=np.complex64)
    if filter_size % 2 == 1:
        n = (filter_size - 1) // 2
        rows = list(range(0, n + 1)) + list(range(dim - n, dim))
        for i, r in enumerate(rows):
            s[i, r] = 1.0
    else:
        n = filter_size // 2
        for i in range(n):                       # top block: rows 0..n-1
            s[i, i] = 1.0
        s[n, n] = 0.5 ** 0.5                     # "middle" combined row
        s[n, dim - n] = 0.5 ** 0.5
        for i in range(n - 1):                   # bottom block: rows dim-n+1..dim-1
            s[n + 1 + i, dim - n + 1 + i] = 1.0
    return s


def _build_fused_matrix(H, W, filter_size):
    """Returns M_comb of shape (fs*fs, H*W), float32, with
    out_img.reshape(fs*fs) = M_comb @ img.reshape(H*W)  (before ReLU)."""
    F_h = _dft_matrix(H)
    F_w = _dft_matrix(W)
    Finv = _idft_matrix(filter_size)
    S_r = _selection_matrix(filter_size, H)
    S_c = _selection_matrix(filter_size, W)
    A = Finv @ S_r @ F_h            # (fs, H) complex
    Bm = Finv @ S_c @ F_w           # (fs, W) complex
    # out[i, j] = sum_{h, w} Re(A[i, h] * B[j, w]) * x[h, w]
    M = np.real(np.einsum('ih,jw->ijhw', A, Bm))
    M = M.reshape(filter_size * filter_size, H * W).astype(np.float32)
    return jnp.asarray(M)


def _choose_tile(n_images, hw, elem_bytes=4):
    """Pick (TILE_BC, padded image count).

    Sized so 2 double-buffered input blocks stay <= ~12 MiB (under every
    generation's default scoped VMEM: 16 MiB v5e, 32 MiB v6e/v7x), with TILE_BC
    a multiple of 128 when tiling (lane-dense output), and >= 2 grid steps so
    both v7x TensorCores get work.
    """
    if n_images <= 256:
        return n_images, n_images           # single full-extent block
    budget_rows = (12 * 1024 * 1024) // (2 * hw * elem_bytes)
    tile = max(128, (budget_rows // 128) * 128)
    tile = min(tile, 2048)
    # keep at least 2 grid steps (v7x megacore) when the batch allows it
    tile = min(tile, 128 * ((n_images + 2 * 128 - 1) // (2 * 128)))
    n_pad = ((n_images + tile - 1) // tile) * tile
    return tile, n_pad


# ---------------------------------------------------------------------------
# Pallas kernel: lane-dense  relu( M_comb @ X_blk^T )
# ---------------------------------------------------------------------------
def _spectral_pool_kernel(x_ref, m_ref, o_ref, *, precision):
    # x_ref: (TILE_BC, H*W)  images (flattened) for this grid step
    # m_ref: (fs*fs, H*W)    fused transform (constant across the grid)
    # o_ref: (fs*fs, TILE_BC) lane-dense output slab (images along lanes)
    y = lax.dot_general(
        m_ref[...], x_ref[...],
        dimension_numbers=(((1,), (1,)), ((), ())),   # contract H*W on both
        precision=precision,
        preferred_element_type=jnp.float32,
    )                                                 # (fs*fs, TILE_BC)
    o_ref[...] = jnp.maximum(y, 0.0)


def spectral_pooling(x, filter_size=3, precision=lax.Precision.HIGHEST):
    """x: (B, C, H, W) float32/bfloat16 (NCHW). Returns (B, C, fs, fs) float32."""
    B, C, H, W = x.shape
    fs = int(filter_size)
    n = B * C
    hw = H * W

    m_comb = _build_fused_matrix(H, W, fs)            # (fs*fs, H*W) f32

    # Keep bf16 inputs as bf16 (halves HBM read); otherwise compute in f32.
    compute_dtype = jnp.bfloat16 if x.dtype == jnp.bfloat16 else jnp.float32
    x_flat = x.reshape(n, hw).astype(compute_dtype)   # no-op cast for f32 input
    m_comb = m_comb.astype(compute_dtype)

    tile, n_pad = _choose_tile(n, hw, elem_bytes=jnp.dtype(compute_dtype).itemsize)
    if n_pad != n:
        x_flat = jnp.pad(x_flat, ((0, n_pad - n), (0, 0)))

    grid = (n_pad // tile,)

    kernel = functools.partial(_spectral_pool_kernel, precision=precision)

    out = pl.pallas_call(
        kernel,
        out_shape=jax.ShapeDtypeStruct((fs * fs, n_pad), jnp.float32),
        grid_spec=pltpu.PrefetchScalarGridSpec(
            num_scalar_prefetch=0,
            grid=grid,
            in_specs=[
                # TILE_BC images per step (big DMAs, amortizes grid overhead)
                pl.BlockSpec((tile, hw), lambda i: (i, 0)),
                # fused transform: constant block index -> stays VMEM-resident
                # (tiny: fs*fs x H*W; double-buffering it costs ~nothing)
                pl.BlockSpec((fs * fs, hw), lambda i: (0, 0)),
            ],
            # lane-dense output: images along the 128-lane axis
            out_specs=pl.BlockSpec((fs * fs, tile), lambda i: (0, i)),
        ),
        compiler_params=pltpu.CompilerParams(
            dimension_semantics=("parallel",),
            vmem_limit_bytes=32 * 1024 * 1024,   # >= default on v5e, safe on v6e/v7x
        ),
    )(x_flat, m_comb)

    out = out[:, :n]                                  # drop padded images
    return out.T.reshape(B, C, fs, fs)                # cheap layout plumbing


# ---------------------------------------------------------------------------
# Pure-JAX reference (mirrors the PyTorch forward, odd filter_size path)
# ---------------------------------------------------------------------------
def _reference(x, filter_size=3):
    im_fft = jnp.fft.fft2(x.astype(jnp.complex64))
    assert filter_size % 2 == 1
    n = (filter_size - 1) // 2
    top_left = im_fft[:, :, :n + 1, :n + 1]
    top_right = im_fft[:, :, :n + 1, -n:]
    bottom_left = im_fft[:, :, -n:, :n + 1]
    bottom_right = im_fft[:, :, -n:, -n:]
    top = jnp.concatenate([top_left, top_right], axis=3)
    bottom = jnp.concatenate([bottom_left, bottom_right], axis=3)
    cropped = jnp.concatenate([top, bottom], axis=2)
    im_out = jnp.real(jnp.fft.ifft2(cropped))
    return jnp.maximum(im_out, 0.0)


if __name__ == "__main__":
    key = jax.random.PRNGKey(0)
    filter_size = 3

    # --- small shape consistent with the module (single-block path) ---
    B, C, H, W = 2, 4, 16, 16
    x = jax.random.normal(key, (B, C, H, W), dtype=jnp.float32)

    out = spectral_pooling(x, filter_size=filter_size)
    out = jax.block_until_ready(out)

    ref = _reference(x, filter_size=filter_size)
    assert out.shape == (B, C, filter_size, filter_size)
    np.testing.assert_allclose(np.asarray(out), np.asarray(ref),
                               atol=1e-3, rtol=1e-3)

    # --- sanity-check the tiled/padded multi-step path (still small) ---
    B2, C2 = 4, 80                                   # B*C = 320 -> 2 grid steps + padding
    x2 = jax.random.normal(jax.random.PRNGKey(1), (B2, C2, H, W), dtype=jnp.float32)
    out2 = jax.block_until_ready(spectral_pooling(x2, filter_size=filter_size))
    ref2 = _reference(x2, filter_size=filter_size)
    np.testing.assert_allclose(np.asarray(out2), np.asarray(ref2),
                               atol=1e-3, rtol=1e-3)

    print("KERNEL_OK")
</pallas_src>

<mosaic_0001>
module attributes {stable_mosaic.version = 11 : i64} {
  func.func @_spectral_pool_kernel(%arg0: i32, %arg1: memref<8x256xf32, #tpu.memory_space<vmem>>, %arg2: memref<9x256xf32, #tpu.memory_space<vmem>>, %arg3: memref<9x8xf32, #tpu.memory_space<vmem>>) attributes {dimension_semantics = [#tpu.dimension_semantics<parallel>], iteration_bounds = array<i64: 1>, scalar_prefetch = 0 : i64, scratch_operands = 0 : i64, tpu.core_type = #tpu.core_type<tc>, window_params = [{transform_indices = @transform_0, window_bounds = array<i64: 8, 256>}, {pipeline_mode = #tpu.pipeline_mode<synchronous>, transform_indices = @transform_1, window_bounds = array<i64: 9, 256>}, {transform_indices = @transform_2, window_bounds = array<i64: 9, 8>}]} {
    %c0 = arith.constant 0 : index
    %c0_0 = arith.constant 0 : index
    %0 = vector.load %arg2[%c0, %c0_0] : memref<9x256xf32, #tpu.memory_space<vmem>>, vector<9x256xf32>
    %c0_1 = arith.constant 0 : index
    %c0_2 = arith.constant 0 : index
    %1 = vector.load %arg1[%c0_1, %c0_2] : memref<8x256xf32, #tpu.memory_space<vmem>>, vector<8x256xf32>
    %cst = arith.constant dense<0.000000e+00> : vector<9x8xf32>
    %2 = tpu.matmul %0, %1, %cst {dimension_numbers = #tpu.dot_dimension_numbers<[1], [1], [0], [0], [0, 0, 1, 0], [], []>, precision = #tpu.contract_precision<fp32>} : vector<9x256xf32>, vector<8x256xf32>, vector<9x8xf32> -> vector<9x8xf32>
    %cst_3 = arith.constant 0.000000e+00 : f32
    %3 = vector.broadcast %cst_3 : f32 to vector<9x8xf32>
    %4 = arith.maximumf %2, %3 : vector<9x8xf32>
    %c0_4 = arith.constant 0 : index
    %c0_5 = arith.constant 0 : index
    %5 = vector.load %arg3[%c0_4, %c0_5] : memref<9x8xf32, #tpu.memory_space<vmem>>, vector<9x8xf32>
    tpu.vector_store %arg3[%c0_4, %c0_5], %4 {strides = array<i32>} : memref<9x8xf32, #tpu.memory_space<vmem>>, vector<9x8xf32>,
    return
  }
  func.func @transform_0(%arg0: i32) -> (i32, i32) {
    %c0_i32 = arith.constant 0 : i32
    %c0_i32_0 = arith.constant 0 : i32
    return %arg0, %c0_i32 : i32, i32
  }
  func.func @transform_1(%arg0: i32) -> (i32, i32) {
    %c0_i32 = arith.constant 0 : i32
    %c0_i32_0 = arith.constant 0 : i32
    %c0_i32_1 = arith.constant 0 : i32
    return %c0_i32, %c0_i32_0 : i32, i32
  }
  func.func @transform_2(%arg0: i32) -> (i32, i32) {
    %c0_i32 = arith.constant 0 : i32
    %c0_i32_0 = arith.constant 0 : i32
    return %c0_i32, %arg0 : i32, i32
  }
}

</mosaic_0001>

<llo_original>
// kernel: tpu_custom_call.1
$region0: #{tpu_custom_call.1}
  #allocation0 [shape = 'u32[]', space=smem, size = 0x4, offset = 0x4, fixed_abs, tag = 'smem constant byte address 0x4 - core index']
  #allocation1 [shape = 'u32[144,128]{1,0:T(1,128)}', space=vmem, size = 0x12000, scoped, tag = 'internal scratch']
  %s0 = inlined_call_operand.hbm [shape: f32[8,256], index: 0, kind: input, shape index: {}]
  %s1 = inlined_call_operand.hbm [shape: f32[9,256], index: 1, kind: input, shape index: {}]
  %s2 = inlined_call_operand.vmem [shape: f32[9,8], index: 2, kind: output, shape index: {}]
  %s3 = sld [smem:[#allocation0]]
  $region26: #{tpu_custom_call.1} parent=0
    _
  %s5 = ssub.s32 1, %s3
  %s6 = scalar_select 0, %s5, %s3
  $region1: #{tpu_custom_call.1} parent=0
    #allocation2 [shape = 'u8[8192]{0}', space=vmem, size = 0x2000, scoped, tag = 'input window, operand 0, single buffered']
    #allocation3 [shape = 's32[1]{0}', space=sflag, size = 0x4, scoped, tag = 'scoped memory for tpu_custom_call.1']
    #allocation4 [shape = 'u8[16384]{0}', space=vmem, size = 0x4000, scoped, tag = 'input window, operand 1, single buffered']
    #allocation5 [shape = 's32[1]{0}', space=sflag, size = 0x4, scoped, tag = 'scoped memory for tpu_custom_call.1']
    %7 = vsyncpa [#allocation3], 0
    %8 = vsyncpa [#allocation5], 0
    // Predicated region
    $region2: #{tpu_custom_call.1} parent=1 // pred_check
      _
    $region3: #{tpu_custom_call.1} parent=1 // pred_check_branch
      %10 = sbr.rel (0) target = $region5
    $region4: #{tpu_custom_call.1} parent=1 // pred_region
      %s12 = ssub.s32 256, 256
      %13 = vsyncadd [#allocation3], %s12
      %s15 = sshll.u32 [#allocation2], 4
      %s16 = int_to_ptr.vmem [resolvable:$true] %s15
      %18 = dma.hbm_to_vmem [thread:$0]  %s0, 256, %s16, [#allocation3]
    $region5: #{tpu_custom_call.1} parent=1 // pred_fallthru
      _
    // Predicated region
    $region6: #{tpu_custom_call.1} parent=1 // pred_check
      _
    $region7: #{tpu_custom_call.1} parent=1 // pred_check_branch
      %20 = sbr.rel (0) target = $region9
    $region8: #{tpu_custom_call.1} parent=1 // pred_region
      %s22 = ssub.s32 512, 512
      %23 = vsyncadd [#allocation5], %s22
      %s24 = sshll.u32 [#allocation4], 4
      %s25 = int_to_ptr.vmem [resolvable:$true] %s24
      %30 = dma.hbm_to_vmem [thread:$0]  %s1, 512, %s25, [#allocation5], 256, 256, 16
    $region9: #{tpu_custom_call.1} parent=1 // pred_fallthru
      _
    // Predicated region
    $region10: #{tpu_custom_call.1} parent=1 // pred_check
      _
    $region11: #{tpu_custom_call.1} parent=1 // pred_check_branch
      %32 = sbr.rel (0) target = $region13
    $region12: #{tpu_custom_call.1} parent=1 // pred_region
      %33 = dma.done [#allocation3], 256
    $region13: #{tpu_custom_call.1} parent=1 // pred_fallthru
      _
    // Predicated region
    $region14: #{tpu_custom_call.1} parent=1 // pred_check
      _
    $region15: #{tpu_custom_call.1} parent=1 // pred_check_branch
      %35 = sbr.rel (0) target = $region17
    $region16: #{tpu_custom_call.1} parent=1 // pred_region
      %36 = dma.done [#allocation5], 512
    $region17: #{tpu_custom_call.1} parent=1 // pred_fallthru
      _
    %v37 = vld [vmem:[#allocation4] sm:$0xff]
    %v38 = vld [vmem:[#allocation4 + $0x8] sm:$0xff]
    %v39 = vld [vmem:[#allocation4 + $0x10] sm:$0x1]
    %v40 = vld [vmem:[#allocation4 + $0x18] sm:$0x1]
    %v41 = vld [vmem:[#allocation2] sm:$0xff]
    %v42 = vld [vmem:[#allocation2 + $0x8] sm:$0xff]
    %v43 = vand.u32 %v42, 4294901760
    %44 = vmatprep.subr.mxu0 %v43
    %v45 = vand.u32 %v41, 4294901760
    %46 = vmatpush1.xpose.msra.mxu0 %v45
    %47 = vmatprep.subr.mxu0 0.0
    %48 = vmatpush1.xpose.msra.mxu0 0.0
    %49 = vmatprep.subr.mxu0 0.0
    %50 = vmatpush1.xpose.msra.mxu0 0.0
    %51 = vmatprep.subr.mxu0 0.0
    %52 = vmatpush1.xpose.msra.mxu0 0.0
    %53 = vmatprep.subr.mxu0 0.0
    %54 = vmatpush1.xpose.msra.mxu0 0.0
    %55 = vmatprep.subr.mxu0 0.0
    %56 = vmatpush1.xpose.msra.mxu0 0.0
    %57 = vmatprep.subr.mxu0 0.0
    %58 = vmatpush1.xpose.msra.mxu0 0.0
    %59 = vmatprep.subr.mxu0 0.0
    %60 = vmatpush1.xpose.msra.mxu0 0.0
    %61 = vmatprep.subr.mxu0 0.0
    %62 = vmatpush1.xpose.msra.mxu0 0.0
    %63 = vmatprep.subr.mxu0 0.0
    %64 = vmatpush1.xpose.msra.mxu0 0.0
    %65 = vmatprep.subr.mxu0 0.0
    %66 = vmatpush1.xpose.msra.mxu0 0.0
    %67 = vmatprep.subr.mxu0 0.0
    %68 = vmatpush1.xpose.msra.mxu0 0.0
    %69 = vmatprep.subr.mxu0 0.0
    %70 = vmatpush1.xpose.msra.mxu0 0.0
    %71 = vmatprep.subr.mxu0 0.0
    %72 = vmatpush1.xpose.msra.mxu0 0.0
    %73 = vmatprep.subr.mxu0 0.0
    %74 = vmatpush1.xpose.msra.mxu0 0.0
    %75 = vmatprep.subr.mxu0 0.0
    %76 = vmatpush1.xpose.msra.mxu0 0.0
    %77 = vmatprep.subr.mxu0 0.0
    %78 = vmatpush1.xpose.msra.mxu0 0.0
    %79 = vmatprep.subr.mxu0 0.0
    %80 = vmatpush1.xpose.msra.mxu0 0.0
    %81 = vmatprep.subr.mxu0 0.0
    %82 = vmatpush1.xpose.msra.mxu0 0.0
    %83 = vmatprep.subr.mxu0 0.0
    %84 = vmatpush1.xpose.msra.mxu0 0.0
    %85 = vmatprep.subr.mxu0 0.0
    %86 = vmatpush1.xpose.msra.mxu0 0.0
    %87 = vmatprep.subr.mxu0 0.0
    %88 = vmatpush1.xpose.msra.mxu0 0.0
    %89 = vmatprep.subr.mxu0 0.0
    %90 = vmatpush1.xpose.msra.mxu0 0.0
    %91 = vmatprep.subr.mxu0 0.0
    %92 = vmatpush1.xpose.msra.mxu0 0.0
    %93 = vmatprep.subr.mxu0 0.0
    %94 = vmatpush1.xpose.msra.mxu0 0.0
    %95 = vmatprep.subr.mxu0 0.0
    %96 = vmatpush1.xpose.msra.mxu0 0.0
    %97 = vmatprep.subr.mxu0 0.0
    %98 = vmatpush1.xpose.msra.mxu0 0.0
    %99 = vmatprep.subr.mxu0 0.0
    %100 = vmatpush1.xpose.msra.mxu0 0.0
    %101 = vmatprep.subr.mxu0 0.0
    %102 = vmatpush1.xpose.msra.mxu0 0.0
    %103 = vmatprep.subr.mxu0 0.0
    %104 = vmatpush1.xpose.msra.mxu0 0.0
    %105 = vmatprep.subr.mxu0 0.0
    %106 = vmatpush1.xpose.msra.mxu0 0.0
    %107 = vmatprep.subr.mxu0 0.0
    %108 = vmatpush1.xpose.msra.mxu0 0.0
    %v109 = vand.u32 %v38, 4294901760
    %v110 = vsub.f32 %v38, %v109
    %v111 = vand.u32 %v110, 4294901760
    %v112 = vsub.f32 %v110, %v111
    %v113 = vand.u32 %v112, 4294901760
    %114 = vmatprep.mubr.f32.mxu0 %v113
    %v115 = vand.u32 %v37, 4294901760
    %v116 = vsub.f32 %v37, %v115
    %v117 = vand.u32 %v116, 4294901760
    %v118 = vsub.f32 %v116, %v117
    %v119 = vand.u32 %v118, 4294901760
    %120 = vmatmul.mubr.f32.gmra.mrb[0].mxu0 %v119
    %v121 = vpop.f32.mrb[0].mxu0
    %v122 = vadd.f32 0.0, %v121
    %v123 = vpop.f32.mrb[0].mxu0
    %v124 = vand.u32 %v40, 4294901760
    %v125 = vsub.f32 %v40, %v124
    %v126 = vand.u32 %v125, 4294901760
    %v127 = vsub.f32 %v125, %v126
    %v128 = vand.u32 %v127, 4294901760
    %129 = vmatprep.mubr.f32.mxu0 %v128
    %v130 = vand.u32 %v39, 4294901760
    %v131 = vsub.f32 %v39, %v130
    %v132 = vand.u32 %v131, 4294901760
    %v133 = vsub.f32 %v131, %v132
    %v134 = vand.u32 %v133, 4294901760
    %135 = vmatmul.mubr.f32.gmra.mrb[0].mxu0 %v134
    %v136 = vpop.f32.mrb[0].mxu0
    %v137 = vadd.f32 0.0, %v136
    %v138 = vpop.f32.mrb[0].mxu0
    %139 = vdwg.mxu0
    %v140 = vand.u32 %v42, 4294901760
    %v141 = vsub.f32 %v42, %v140
    %v142 = vand.u32 %v141, 4294901760
    %v143 = vsub.f32 %v141, %v142
    %v144 = vand.u32 %v143, 4294901760
    %145 = vmatprep.subr.mxu0 %v144
    %v146 = vand.u32 %v41, 4294901760
    %v147 = vsub.f32 %v41, %v146
    %v148 = vand.u32 %v147, 4294901760
    %v149 = vsub.f32 %v147, %v148
    %v150 = vand.u32 %v149, 4294901760
    %151 = vmatpush1.xpose.msra.mxu0 %v150
    %152 = vmatprep.subr.mxu0 0.0
    %153 = vmatpush1.xpose.msra.mxu0 0.0
    %154 = vmatprep.subr.mxu0 0.0
    %155 = vmatpush1.xpose.msra.mxu0 0.0
    %156 = vmatprep.subr.mxu0 0.0
    %157 = vmatpush1.xpose.msra.mxu0 0.0
    %158 = vmatprep.subr.mxu0 0.0
    %159 = vmatpush1.xpose.msra.mxu0 0.0
    %160 = vmatprep.subr.mxu0 0.0
    %161 = vmatpush1.xpose.msra.mxu0 0.0
    %162 = vmatprep.subr.mxu0 0.0
    %163 = vmatpush1.xpose.msra.mxu0 0.0
    %164 = vmatprep.subr.mxu0 0.0
    %165 = vmatpush1.xpose.msra.mxu0 0.0
    %166 = vmatprep.subr.mxu0 0.0
    %167 = vmatpush1.xpose.msra.mxu0 0.0
    %168 = vmatprep.subr.mxu0 0.0
    %169 = vmatpush1.xpose.msra.mxu0 0.0
    %170 = vmatprep.subr.mxu0 0.0
    %171 = vmatpush1.xpose.msra.mxu0 0.0
    %172 = vmatprep.subr.mxu0 0.0
    %173 = vmatpush1.xpose.msra.mxu0 0.0
    %174 = vmatprep.subr.mxu0 0.0
    %175 = vmatpush1.xpose.msra.mxu0 0.0
    %176 = vmatprep.subr.mxu0 0.0
    %177 = vmatpush1.xpose.msra.mxu0 0.0
    %178 = vmatprep.subr.mxu0 0.0
    %179 = vmatpush1.xpose.msra.mxu0 0.0
    %180 = vmatprep.subr.mxu0 0.0
    %181 = vmatpush1.xpose.msra.mxu0 0.0
    %182 = vmatprep.subr.mxu0 0.0
    %183 = vmatpush1.xpose.msra.mxu0 0.0
    %184 = vmatprep.subr.mxu0 0.0
    %185 = vmatpush1.xpose.msra.mxu0 0.0
    %186 = vmatprep.subr.mxu0 0.0
    %187 = vmatpush1.xpose.msra.mxu0 0.0
    %188 = vmatprep.subr.mxu0 0.0
    %189 = vmatpush1.xpose.msra.mxu0 0.0
    %190 = vmatprep.subr.mxu0 0.0
    %191 = vmatpush1.xpose.msra.mxu0 0.0
    %192 = vmatprep.subr.mxu0 0.0
    %193 = vmatpush1.xpose.msra.mxu0 0.0
    %194 = vmatprep.subr.mxu0 0.0
    %195 = vmatpush1.xpose.msra.mxu0 0.0
    %196 = vmatprep.subr.mxu0 0.0
    %197 = vmatpush1.xpose.msra.mxu0 0.0
    %198 = vmatprep.subr.mxu0 0.0
    %199 = vmatpush1.xpose.msra.mxu0 0.0
    %200 = vmatprep.subr.mxu0 0.0
    %201 = vmatpush1.xpose.msra.mxu0 0.0
    %202 = vmatprep.subr.mxu0 0.0
    %203 = vmatpush1.xpose.msra.mxu0 0.0
    %204 = vmatprep.subr.mxu0 0.0
    %205 = vmatpush1.xpose.msra.mxu0 0.0
    %206 = vmatprep.subr.mxu0 0.0
    %207 = vmatpush1.xpose.msra.mxu0 0.0
    %208 = vmatprep.subr.mxu0 0.0
    %209 = vmatpush1.xpose.msra.mxu0 0.0
    %210 = vmatprep.subr.mxu0 0.0
    %211 = vmatpush1.xpose.msra.mxu0 0.0
    %212 = vmatprep.subr.mxu0 0.0
    %213 = vmatpush1.xpose.msra.mxu0 0.0
    %v214 = vand.u32 %v38, 4294901760
    %215 = vmatprep.mubr.f32.mxu0 %v214
    %v216 = vand.u32 %v37, 4294901760
    %217 = vmatmul.mubr.f32.gmra.mrb[0].mxu0 %v216
    %v218 = vpop.f32.mrb[0].mxu0
    %v219 = vadd.f32 %v122, %v218
    %v220 = vpop.f32.mrb[0].mxu0
    %v221 = vand.u32 %v40, 4294901760
    %222 = vmatprep.mubr.f32.mxu0 %v221
    %v223 = vand.u32 %v39, 4294901760
    %224 = vmatmul.mubr.f32.gmra.mrb[0].mxu0 %v223
    %v225 = vpop.f32.mrb[0].mxu0
    %v226 = vadd.f32 %v137, %v225
    %v227 = vpop.f32.mrb[0].mxu0
    %228 = vdwg.mxu0
    %v229 = vand.u32 %v42, 4294901760
    %v230 = vsub.f32 %v42, %v229
    %231 = vmatprep.subr.mxu0 %v230
    %v232 = vand.u32 %v41, 4294901760
    %v233 = vsub.f32 %v41, %v232
    %234 = vmatpush1.xpose.msra.mxu0 %v233
    %235 = vmatprep.subr.mxu0 0.0
    %236 = vmatpush1.xpose.msra.mxu0 0.0
    %237 = vmatprep.subr.mxu0 0.0
    %238 = vmatpush1.xpose.msra.mxu0 0.0
    %239 = vmatprep.subr.mxu0 0.0
    %240 = vmatpush1.xpose.msra.mxu0 0.0
    %241 = vmatprep.subr.mxu0 0.0
    %242 = vmatpush1.xpose.msra.mxu0 0.0
    %243 = vmatprep.subr.mxu0 0.0
    %244 = vmatpush1.xpose.msra.mxu0 0.0
    %245 = vmatprep.subr.mxu0 0.0
    %246 = vmatpush1.xpose.msra.mxu0 0.0
    %247 = vmatprep.subr.mxu0 0.0
    %248 = vmatpush1.xpose.msra.mxu0 0.0
    %249 = vmatprep.subr.mxu0 0.0
    %250 = vmatpush1.xpose.msra.mxu0 0.0
    %251 = vmatprep.subr.mxu0 0.0
    %252 = vmatpush1.xpose.msra.mxu0 0.0
    %253 = vmatprep.subr.mxu0 0.0
    %254 = vmatpush1.xpose.msra.mxu0 0.0
    %255 = vmatprep.subr.mxu0 0.0
    %256 = vmatpush1.xpose.msra.mxu0 0.0
    %257 = vmatprep.subr.mxu0 0.0
    %258 = vmatpush1.xpose.msra.mxu0 0.0
    %259 = vmatprep.subr.mxu0 0.0
    %260 = vmatpush1.xpose.msra.mxu0 0.0
    %261 = vmatprep.subr.mxu0 0.0
    %262 = vmatpush1.xpose.msra.mxu0 0.0
    %263 = vmatprep.subr.mxu0 0.0
    %264 = vmatpush1.xpose.msra.mxu0 0.0
    %265 = vmatprep.subr.mxu0 0.0
    %266 = vmatpush1.xpose.msra.mxu0 0.0
    %267 = vmatprep.subr.mxu0 0.0
    %268 = vmatpush1.xpose.msra.mxu0 0.0
    %269 = vmatprep.subr.mxu0 0.0
    %270 = vmatpush1.xpose.msra.mxu0 0.0
    %271 = vmatprep.subr.mxu0 0.0
    %272 = vmatpush1.xpose.msra.mxu0 0.0
    %273 = vmatprep.subr.mxu0 0.0
    %274 = vmatpush1.xpose.msra.mxu0 0.0
    %275 = vmatprep.subr.mxu0 0.0
    %276 = vmatpush1.xpose.msra.mxu0 0.0
    %277 = vmatprep.subr.mxu0 0.0
    %278 = vmatpush1.xpose.msra.mxu0 0.0
    %279 = vmatprep.subr.mxu0 0.0
    %280 = vmatpush1.xpose.msra.mxu0 0.0
    %281 = vmatprep.subr.mxu0 0.0
    %282 = vmatpush1.xpose.msra.mxu0 0.0
    %283 = vmatprep.subr.mxu0 0.0
    %284 = vmatpush1.xpose.msra.mxu0 0.0
    %285 = vmatprep.subr.mxu0 0.0
    %286 = vmatpush1.xpose.msra.mxu0 0.0
    %287 = vmatprep.subr.mxu0 0.0
    %288 = vmatpush1.xpose.msra.mxu0 0.0
    %289 = vmatprep.subr.mxu0 0.0
    %290 = vmatpush1.xpose.msra.mxu0 0.0
    %291 = vmatprep.subr.mxu0 0.0
    %292 = vmatpush1.xpose.msra.mxu0 0.0
    %293 = vmatprep.subr.mxu0 0.0
    %294 = vmatpush1.xpose.msra.mxu0 0.0
    %295 = vmatprep.subr.mxu0 0.0
    %296 = vmatpush1.xpose.msra.mxu0 0.0
    %v297 = vand.u32 %v38, 4294901760
    %v298 = vsub.f32 %v38, %v297
    %299 = vmatprep.mubr.f32.mxu0 %v298
    %v300 = vand.u32 %v37, 4294901760
    %v301 = vsub.f32 %v37, %v300
    %302 = vmatmul.mubr.f32.gmra.mrb[0].mxu0 %v301
    %v303 = vpop.f32.mrb[0].mxu0
    %v304 = vadd.f32 %v219, %v303
    %v305 = vpop.f32.mrb[0].mxu0
    %v306 = vand.u32 %v40, 4294901760
    %v307 = vsub.f32 %v40, %v306
    %308 = vmatprep.mubr.f32.mxu0 %v307
    %v309 = vand.u32 %v39, 4294901760
    %v310 = vsub.f32 %v39, %v309
    %311 = vmatmul.mubr.f32.gmra.mrb[0].mxu0 %v310
    %v312 = vpop.f32.mrb[0].mxu0
    %v313 = vadd.f32 %v226, %v312
    %v314 = vpop.f32.mrb[0].mxu0
    %315 = vdwg.mxu0
    %v316 = vand.u32 %v42, 4294901760
    %317 = vmatprep.subr.mxu0 %v316
    %v318 = vand.u32 %v41, 4294901760
    %319 = vmatpush1.xpose.msra.mxu0 %v318
    %320 = vmatprep.subr.mxu0 0.0
    %321 = vmatpush1.xpose.msra.mxu0 0.0
    %322 = vmatprep.subr.mxu0 0.0
    %323 = vmatpush1.xpose.msra.mxu0 0.0
    %324 = vmatprep.subr.mxu0 0.0
    %325 = vmatpush1.xpose.msra.mxu0 0.0
    %326 = vmatprep.subr.mxu0 0.0
    %327 = vmatpush1.xpose.msra.mxu0 0.0
    %328 = vmatprep.subr.mxu0 0.0
    %329 = vmatpush1.xpose.msra.mxu0 0.0
    %330 = vmatprep.subr.mxu0 0.0
    %331 = vmatpush1.xpose.msra.mxu0 0.0
    %332 = vmatprep.subr.mxu0 0.0
    %333 = vmatpush1.xpose.msra.mxu0 0.0
    %334 = vmatprep.subr.mxu0 0.0
    %335 = vmatpush1.xpose.msra.mxu0 0.0
    %336 = vmatprep.subr.mxu0 0.0
    %337 = vmatpush1.xpose.msra.mxu0 0.0
    %338 = vmatprep.subr.mxu0 0.0
    %339 = vmatpush1.xpose.msra.mxu0 0.0
    %340 = vmatprep.subr.mxu0 0.0
    %341 = vmatpush1.xpose.msra.mxu0 0.0
    %342 = vmatprep.subr.mxu0 0.0
    %343 = vmatpush1.xpose.msra.mxu0 0.0
    %344 = vmatprep.subr.mxu0 0.0
    %345 = vmatpush1.xpose.msra.mxu0 0.0
    %346 = vmatprep.subr.mxu0 0.0
    %347 = vmatpush1.xpose.msra.mxu0 0.0
    %348 = vmatprep.subr.mxu0 0.0
    %349 = vmatpush1.xpose.msra.mxu0 0.0
    %350 = vmatprep.subr.mxu0 0.0
    %351 = vmatpush1.xpose.msra.mxu0 0.0
    %352 = vmatprep.subr.mxu0 0.0
    %353 = vmatpush1.xpose.msra.mxu0 0.0
    %354 = vmatprep.subr.mxu0 0.0
    %355 = vmatpush1.xpose.msra.mxu0 0.0
    %356 = vmatprep.subr.mxu0 0.0
    %357 = vmatpush1.xpose.msra.mxu0 0.0
    %358 = vmatprep.subr.mxu0 0.0
    %359 = vmatpush1.xpose.msra.mxu0 0.0
    %360 = vmatprep.subr.mxu0 0.0
    %361 = vmatpush1.xpose.msra.mxu0 0.0
    %362 = vmatprep.subr.mxu0 0.0
    %363 = vmatpush1.xpose.msra.mxu0 0.0
    %364 = vmatprep.subr.mxu0 0.0
    %365 = vmatpush1.xpose.msra.mxu0 0.0
    %366 = vmatprep.subr.mxu0 0.0
    %367 = vmatpush1.xpose.msra.mxu0 0.0
    %368 = vmatprep.subr.mxu0 0.0
    %369 = vmatpush1.xpose.msra.mxu0 0.0
    %370 = vmatprep.subr.mxu0 0.0
    %371 = vmatpush1.xpose.msra.mxu0 0.0
    %372 = vmatprep.subr.mxu0 0.0
    %373 = vmatpush1.xpose.msra.mxu0 0.0
    %374 = vmatprep.subr.mxu0 0.0
    %375 = vmatpush1.xpose.msra.mxu0 0.0
    %376 = vmatprep.subr.mxu0 0.0
    %377 = vmatpush1.xpose.msra.mxu0 0.0
    %378 = vmatprep.subr.mxu0 0.0
    %379 = vmatpush1.xpose.msra.mxu0 0.0
    %380 = vmatprep.subr.mxu0 0.0
    %381 = vmatpush1.xpose.msra.mxu0 0.0
    %v382 = vand.u32 %v38, 4294901760
    %v383 = vsub.f32 %v38, %v382
    %v384 = vand.u32 %v383, 4294901760
    %385 = vmatprep.mubr.f32.mxu0 %v384
    %v386 = vand.u32 %v37, 4294901760
    %v387 = vsub.f32 %v37, %v386
    %v388 = vand.u32 %v387, 4294901760
    %389 = vmatmul.mubr.f32.gmra.mrb[0].mxu0 %v388
    %v390 = vpop.f32.mrb[0].mxu0
    %v391 = vadd.f32 %v304, %v390
    %v392 = vpop.f32.mrb[0].mxu0
    %v393 = vand.u32 %v40, 4294901760
    %v394 = vsub.f32 %v40, %v393
    %v395 = vand.u32 %v394, 4294901760
    %396 = vmatprep.mubr.f32.mxu0 %v395
    %v397 = vand.u32 %v39, 4294901760
    %v398 = vsub.f32 %v39, %v397
    %v399 = vand.u32 %v398, 4294901760
    %400 = vmatmul.mubr.f32.gmra.mrb[0].mxu0 %v399
    %v401 = vpop.f32.mrb[0].mxu0
    %v402 = vadd.f32 %v313, %v401
    %v403 = vpop.f32.mrb[0].mxu0
    %404 = vdwg.mxu0
    %v405 = vand.u32 %v42, 4294901760
    %v406 = vsub.f32 %v42, %v405
    %v407 = vand.u32 %v406, 4294901760
    %408 = vmatprep.subr.mxu0 %v407
    %v409 = vand.u32 %v41, 4294901760
    %v410 = vsub.f32 %v41, %v409
    %v411 = vand.u32 %v410, 4294901760
    %412 = vmatpush1.xpose.msra.mxu0 %v411
    %413 = vmatprep.subr.mxu0 0.0
    %414 = vmatpush1.xpose.msra.mxu0 0.0
    %415 = vmatprep.subr.mxu0 0.0
    %416 = vmatpush1.xpose.msra.mxu0 0.0
    %417 = vmatprep.subr.mxu0 0.0
    %418 = vmatpush1.xpose.msra.mxu0 0.0
    %419 = vmatprep.subr.mxu0 0.0
    %420 = vmatpush1.xpose.msra.mxu0 0.0
    %421 = vmatprep.subr.mxu0 0.0
    %422 = vmatpush1.xpose.msra.mxu0 0.0
    %423 = vmatprep.subr.mxu0 0.0
    %424 = vmatpush1.xpose.msra.mxu0 0.0
    %425 = vmatprep.subr.mxu0 0.0
    %426 = vmatpush1.xpose.msra.mxu0 0.0
    %427 = vmatprep.subr.mxu0 0.0
    %428 = vmatpush1.xpose.msra.mxu0 0.0
    %429 = vmatprep.subr.mxu0 0.0
    %430 = vmatpush1.xpose.msra.mxu0 0.0
    %431 = vmatprep.subr.mxu0 0.0
    %432 = vmatpush1.xpose.msra.mxu0 0.0
    %433 = vmatprep.subr.mxu0 0.0
    %434 = vmatpush1.xpose.msra.mxu0 0.0
    %435 = vmatprep.subr.mxu0 0.0
    %436 = vmatpush1.xpose.msra.mxu0 0.0
    %437 = vmatprep.subr.mxu0 0.0
    %438 = vmatpush1.xpose.msra.mxu0 0.0
    %439 = vmatprep.subr.mxu0 0.0
    %440 = vmatpush1.xpose.msra.mxu0 0.0
    %441 = vmatprep.subr.mxu0 0.0
    %442 = vmatpush1.xpose.msra.mxu0 0.0
    %443 = vmatprep.subr.mxu0 0.0
    %444 = vmatpush1.xpose.msra.mxu0 0.0
    %445 = vmatprep.subr.mxu0 0.0
    %446 = vmatpush1.xpose.msra.mxu0 0.0
    %447 = vmatprep.subr.mxu0 0.0
    %448 = vmatpush1.xpose.msra.mxu0 0.0
    %449 = vmatprep.subr.mxu0 0.0
    %450 = vmatpush1.xpose.msra.mxu0 0.0
    %451 = vmatprep.subr.mxu0 0.0
    %452 = vmatpush1.xpose.msra.mxu0 0.0
    %453 = vmatprep.subr.mxu0 0.0
    %454 = vmatpush1.xpose.msra.mxu0 0.0
    %455 = vmatprep.subr.mxu0 0.0
    %456 = vmatpush1.xpose.msra.mxu0 0.0
    %457 = vmatprep.subr.mxu0 0.0
    %458 = vmatpush1.xpose.msra.mxu0 0.0
    %459 = vmatprep.subr.mxu0 0.0
    %460 = vmatpush1.xpose.msra.mxu0 0.0
    %461 = vmatprep.subr.mxu0 0.0
    %462 = vmatpush1.xpose.msra.mxu0 0.0
    %463 = vmatprep.subr.mxu0 0.0
    %464 = vmatpush1.xpose.msra.mxu0 0.0
    %465 = vmatprep.subr.mxu0 0.0
    %466 = vmatpush1.xpose.msra.mxu0 0.0
    %467 = vmatprep.subr.mxu0 0.0
    %468 = vmatpush1.xpose.msra.mxu0 0.0
    %469 = vmatprep.subr.mxu0 0.0
    %470 = vmatpush1.xpose.msra.mxu0 0.0
    %471 = vmatprep.subr.mxu0 0.0
    %472 = vmatpush1.xpose.msra.mxu0 0.0
    %473 = vmatprep.subr.mxu0 0.0
    %474 = vmatpush1.xpose.msra.mxu0 0.0
    %v475 = vand.u32 %v38, 4294901760
    %476 = vmatprep.mubr.f32.mxu0 %v475
    %v477 = vand.u32 %v37, 4294901760
    %478 = vmatmul.mubr.f32.gmra.mrb[0].mxu0 %v477
    %v479 = vpop.f32.mrb[0].mxu0
    %v480 = vadd.f32 %v391, %v479
    %v481 = vpop.f32.mrb[0].mxu0
    %v482 = vand.u32 %v40, 4294901760
    %483 = vmatprep.mubr.f32.mxu0 %v482
    %v484 = vand.u32 %v39, 4294901760
    %485 = vmatmul.mubr.f32.gmra.mrb[0].mxu0 %v484
    %v486 = vpop.f32.mrb[0].mxu0
    %v487 = vadd.f32 %v402, %v486
    %v488 = vpop.f32.mrb[0].mxu0
    %489 = vdwg.mxu0
    %v490 = vand.u32 %v42, 4294901760
    %491 = vmatprep.subr.mxu0 %v490
    %v492 = vand.u32 %v41, 4294901760
    %493 = vmatpush1.xpose.msra.mxu0 %v492
    %494 = vmatprep.subr.mxu0 0.0
    %495 = vmatpush1.xpose.msra.mxu0 0.0
    %496 = vmatprep.subr.mxu0 0.0
    %497 = vmatpush1.xpose.msra.mxu0 0.0
    %498 = vmatprep.subr.mxu0 0.0
    %499 = vmatpush1.xpose.msra.mxu0 0.0
    %500 = vmatprep.subr.mxu0 0.0
    %501 = vmatpush1.xpose.msra.mxu0 0.0
    %502 = vmatprep.subr.mxu0 0.0
    %503 = vmatpush1.xpose.msra.mxu0 0.0
    %504 = vmatprep.subr.mxu0 0.0
    %505 = vmatpush1.xpose.msra.mxu0 0.0
    %506 = vmatprep.subr.mxu0 0.0
    %507 = vmatpush1.xpose.msra.mxu0 0.0
    %508 = vmatprep.subr.mxu0 0.0
    %509 = vmatpush1.xpose.msra.mxu0 0.0
    %510 = vmatprep.subr.mxu0 0.0
    %511 = vmatpush1.xpose.msra.mxu0 0.0
    %512 = vmatprep.subr.mxu0 0.0
    %513 = vmatpush1.xpose.msra.mxu0 0.0
    %514 = vmatprep.subr.mxu0 0.0
    %515 = vmatpush1.xpose.msra.mxu0 0.0
    %516 = vmatprep.subr.mxu0 0.0
    %517 = vmatpush1.xpose.msra.mxu0 0.0
    %518 = vmatprep.subr.mxu0 0.0
    %519 = vmatpush1.xpose.msra.mxu0 0.0
    %520 = vmatprep.subr.mxu0 0.0
    %521 = vmatpush1.xpose.msra.mxu0 0.0
    %522 = vmatprep.subr.mxu0 0.0
    %523 = vmatpush1.xpose.msra.mxu0 0.0
    %524 = vmatprep.subr.mxu0 0.0
    %525 = vmatpush1.xpose.msra.mxu0 0.0
    %526 = vmatprep.subr.mxu0 0.0
    %527 = vmatpush1.xpose.msra.mxu0 0.0
    %528 = vmatprep.subr.mxu0 0.0
    %529 = vmatpush1.xpose.msra.mxu0 0.0
    %530 = vmatprep.subr.mxu0 0.0
    %531 = vmatpush1.xpose.msra.mxu0 0.0
    %532 = vmatprep.subr.mxu0 0.0
    %533 = vmatpush1.xpose.msra.mxu0 0.0
    %534 = vmatprep.subr.mxu0 0.0
    %535 = vmatpush1.xpose.msra.mxu0 0.0
    %536 = vmatprep.subr.mxu0 0.0
    %537 = vmatpush1.xpose.msra.mxu0 0.0
    %538 = vmatprep.subr.mxu0 0.0
    %539 = vmatpush1.xpose.msra.mxu0 0.0
    %540 = vmatprep.subr.mxu0 0.0
    %541 = vmatpush1.xpose.msra.mxu0 0.0
    %542 = vmatprep.subr.mxu0 0.0
    %543 = vmatpush1.xpose.msra.mxu0 0.0
    %544 = vmatprep.subr.mxu0 0.0
    %545 = vmatpush1.xpose.msra.mxu0 0.0
    %546 = vmatprep.subr.mxu0 0.0
    %547 = vmatpush1.xpose.msra.mxu0 0.0
    %548 = vmatprep.subr.mxu0 0.0
    %549 = vmatpush1.xpose.msra.mxu0 0.0
    %550 = vmatprep.subr.mxu0 0.0
    %551 = vmatpush1.xpose.msra.mxu0 0.0
    %552 = vmatprep.subr.mxu0 0.0
    %553 = vmatpush1.xpose.msra.mxu0 0.0
    %554 = vmatprep.subr.mxu0 0.0
    %555 = vmatpush1.xpose.msra.mxu0 0.0
    %v556 = vand.u32 %v38, 4294901760
    %557 = vmatprep.mubr.f32.mxu0 %v556
    %v558 = vand.u32 %v37, 4294901760
    %559 = vmatmul.mubr.f32.gmra.mrb[0].mxu0 %v558
    %v560 = vpop.f32.mrb[0].mxu0
    %v561 = vadd.f32 %v480, %v560
    %v562 = vpop.f32.mrb[0].mxu0
    %v563 = vand.u32 %v40, 4294901760
    %564 = vmatprep.mubr.f32.mxu0 %v563
    %v565 = vand.u32 %v39, 4294901760
    %566 = vmatmul.mubr.f32.gmra.mrb[0].mxu0 %v565
    %v567 = vpop.f32.mrb[0].mxu0
    %v568 = vadd.f32 %v487, %v567
    %v569 = vpop.f32.mrb[0].mxu0
    %570 = vdwg.mxu0
    %v571 = vmax.f32 %v561, 0.0
    %v572 = vmax.f32 %v568, 0.0
    %vm573 = vcmask 64512
    %574 = vst.msk [vmem:[%s2] sm:$0xff] %vm573, %v571
    %vm575 = vcmask 57344
    %576 = vst.msk [vmem:[%s2 + $0x8] sm:$0x1] %vm575, %v572
    // Predicated region
    $region18: #{tpu_custom_call.1} parent=1 // pred_check
      _
    $region19: #{tpu_custom_call.1} parent=1 // pred_check_branch
      %578 = sbr.rel (0) target = $region21
    $region20: #{tpu_custom_call.1} parent=1 // pred_region
      _
    $region21: #{tpu_custom_call.1} parent=1 // pred_fallthru
      _
    // Predicated region
    $region22: #{tpu_custom_call.1} parent=1 // pred_check
      _
    $region23: #{tpu_custom_call.1} parent=1 // pred_check_branch
      %580 = sbr.rel (0) target = $region25
    $region24: #{tpu_custom_call.1} parent=1 // pred_region
      _
    $region25: #{tpu_custom_call.1} parent=1 // pred_fallthru
      _
    %581 = vsyncpa [#allocation3], 1
    %582 = vsyncpa [#allocation5], 1

</llo_original>
